<compile_context>
chip_gen: v7x
topology: tpu7x:2x2x1
jax: 0.10.0
libtpu: 0.0.40
codegen_flags: <defaults>
</compile_context>

<pallas_src>
import jax
import jax.numpy as jnp
from jax.experimental import pallas as pl
from jax.experimental.pallas import tpu as pltpu

IN_DIM = 4        # iris features
HIDDEN = 50
OUT_DIM = 3

LANE = 128        # TPU lane width
IN_PAD = 8        # features padded to one sublane group
HID_PAD = 56      # hidden width padded to a multiple of 8
OUT_PAD = 8       # classes padded to one sublane group
PARAM_ROWS = 128  # single (128, 128) parameter slab

# Slab layout (rows x lanes), everything else zero:
#   rows [  0: 56), lanes [0: 8) : W1^T (valid 50x4),  lane 8  column: b1
#   rows [ 56:112), lanes [0:56) : W2^T (valid 50x50), lane 56 column: b2
#   rows [112:120), lanes [0:56) : W3^T (valid 3x50),  lane 56 column: b3
W1_ROW, W2_ROW, W3_ROW = 0, 56, 112
B1_LANE, B2_LANE, B3_LANE = 8, 56, 56

PARAM_DTYPE = jnp.bfloat16   # set to jnp.float32 for full-precision storage


def _mlp_kernel(x_ref, p_ref, o_ref):
    f32 = jnp.float32
    x = x_ref[...]                                                # (8, tb) bf16

    w1t = p_ref[W1_ROW:W1_ROW + HID_PAD, 0:IN_PAD]                # (56, 8)
    b1 = p_ref[W1_ROW:W1_ROW + HID_PAD, B1_LANE:B1_LANE + 1].astype(f32)
    w2t = p_ref[W2_ROW:W2_ROW + HID_PAD, 0:HID_PAD]               # (56, 56)
    b2 = p_ref[W2_ROW:W2_ROW + HID_PAD, B2_LANE:B2_LANE + 1].astype(f32)
    w3t = p_ref[W3_ROW:W3_ROW + OUT_PAD, 0:HID_PAD]               # (8, 56)
    b3 = p_ref[W3_ROW:W3_ROW + OUT_PAD, B3_LANE:B3_LANE + 1].astype(f32)

    # layer1 + ReLU: (56, 8) @ (8, tb) -> (56, tb).  Padded rows/cols are zero,
    # so padding is transparent through matmul + bias + ReLU.
    h1 = jnp.maximum(jnp.dot(w1t, x, preferred_element_type=f32) + b1, 0.0)
    h1 = h1.astype(x.dtype)
    # layer2 + ReLU: (56, 56) @ (56, tb)
    h2 = jnp.maximum(jnp.dot(w2t, h1, preferred_element_type=f32) + b2, 0.0)
    h2 = h2.astype(x.dtype)
    # layer3 logits: (8, 56) @ (56, tb); only sublanes [0, OUT_DIM) are valid.
    logits = jnp.dot(w3t, h2, preferred_element_type=f32) + b3    # (8, tb) f32

    # softmax over the 3 valid classes (sublane axis).  Exact division so each
    # column sums to 1 (the approx EUP reciprocal broke the row-sum check and
    # is not needed -- the kernel is nowhere near EUP/VALU-bound).
    cls = jax.lax.broadcasted_iota(jnp.int32, logits.shape, 0)
    valid = cls < OUT_DIM
    m = jnp.max(jnp.where(valid, logits, -jnp.inf), axis=0, keepdims=True)
    e = jnp.where(valid, jnp.exp(logits - m), 0.0)
    denom = jnp.sum(e, axis=0, keepdims=True)
    o_ref[...] = (e / denom).astype(o_ref.dtype)


def pack_params(params, dtype=PARAM_DTYPE):
    """Pack w1,b1,w2,b2,w3,b3 into one zero-padded (128, 128) slab.

    Weights are stored TRANSPOSED ((out_features, in_features)) so the kernel
    computes h^T = W^T @ x^T with the batch on the 128-lane axis; biases are
    stored as columns in otherwise-unused lanes of the same row groups.
    """
    slab = jnp.zeros((PARAM_ROWS, LANE), jnp.float32)
    slab = slab.at[W1_ROW:W1_ROW + HIDDEN, 0:IN_DIM].set(params["w1"].T)
    slab = slab.at[W1_ROW:W1_ROW + HIDDEN, B1_LANE].set(params["b1"])
    slab = slab.at[W2_ROW:W2_ROW + HIDDEN, 0:HIDDEN].set(params["w2"].T)
    slab = slab.at[W2_ROW:W2_ROW + HIDDEN, B2_LANE].set(params["b2"])
    slab = slab.at[W3_ROW:W3_ROW + OUT_DIM, 0:HIDDEN].set(params["w3"].T)
    slab = slab.at[W3_ROW:W3_ROW + OUT_DIM, B3_LANE].set(params["b3"])
    return slab.astype(dtype)


def _pick_batch_tile(B):
    # Large tiles amortize the ~0.35us per-grid-step overhead, but keep at
    # least two grid steps when the batch allows so both v7x TensorCores get
    # work (the batch axis is "parallel").  v5e/v6e just take the big tile.
    half = ((B + 1) // 2 + LANE - 1) // LANE * LANE
    return max(LANE, min(1024, half))


def mlp_forward(x, param_slab, *, tb=None):
    """x: (B, 4) float; param_slab: (128, 128) from pack_params -> (B, 3) f32."""
    B, d = x.shape
    if tb is None:
        tb = _pick_batch_tile(B)
    n_blocks = pl.cdiv(B, tb)
    B_pad = n_blocks * tb

    # Feature-major (transposed) input: features on sublanes (4 valid of 8),
    # batch on lanes -- 16 B/sample in bf16, no 128-lane padding round-trip.
    x_t = jnp.zeros((IN_PAD, B_pad), param_slab.dtype)
    x_t = x_t.at[:d, :B].set(x.T.astype(param_slab.dtype))

    out_t = pl.pallas_call(
        _mlp_kernel,
        out_shape=jax.ShapeDtypeStruct((OUT_PAD, B_pad), jnp.float32),
        grid=(n_blocks,),
        in_specs=[
            pl.BlockSpec((IN_PAD, tb), lambda i: (0, i)),        # x^T: batch-tiled
            # Constant index_map -> slab DMA'd once, VMEM-resident afterwards.
            pl.BlockSpec((PARAM_ROWS, LANE), lambda i: (0, 0)),
        ],
        out_specs=pl.BlockSpec((OUT_PAD, tb), lambda i: (0, i)),
        compiler_params=pltpu.CompilerParams(
            dimension_semantics=("parallel",)),
    )(x_t, param_slab)

    # Rows 0:3 are the class probabilities; padded batch columns (>= B) only
    # ever saw bias-only activations and are sliced away here.
    return out_t[:OUT_DIM, :B].T


def init_params(key, input_dim=IN_DIM, hidden=HIDDEN, out_dim=OUT_DIM):
    """PyTorch-default-style Linear init (uniform +/- 1/sqrt(fan_in));
    weights stored as (in_features, out_features), biases 1-D."""
    ks = jax.random.split(key, 6)

    def linear(kw, kb, fan_in, fan_out):
        bound = 1.0 / jnp.sqrt(jnp.float32(fan_in))
        w = jax.random.uniform(kw, (fan_in, fan_out), jnp.float32, -bound, bound)
        b = jax.random.uniform(kb, (fan_out,), jnp.float32, -bound, bound)
        return w, b

    w1, b1 = linear(ks[0], ks[1], input_dim, hidden)
    w2, b2 = linear(ks[2], ks[3], hidden, hidden)
    w3, b3 = linear(ks[4], ks[5], hidden, out_dim)
    return {"w1": w1, "b1": b1, "w2": w2, "b2": b2, "w3": w3, "b3": b3}


def _reference(x, p, dtype=PARAM_DTYPE):
    """Pure-JAX reference applying the same bf16 rounding as the kernel."""
    f32 = jnp.float32
    q = lambda a: a.astype(dtype).astype(f32)
    h1 = q(jnp.maximum(q(x) @ q(p["w1"]) + q(p["b1"]), 0.0))
    h2 = q(jnp.maximum(h1 @ q(p["w2"]) + q(p["b2"]), 0.0))
    logits = h2 @ q(p["w3"]) + q(p["b3"])
    return jax.nn.softmax(logits, axis=1)


if __name__ == "__main__":
    key = jax.random.PRNGKey(0)
    k_x, k_p = jax.random.split(key)

    BATCH = 256   # -> two 128-column batch tiles (grid of 2, v7x uses both TCs)

    x = jax.random.normal(k_x, (BATCH, IN_DIM), jnp.float32)
    params = init_params(k_p)
    slab = pack_params(params)

    out = jax.block_until_ready(mlp_forward(x, slab))

    ref = _reference(x, params)
    assert out.shape == (BATCH, OUT_DIM)
    assert bool(jnp.allclose(out, ref, atol=1e-4, rtol=1e-4))
    # exact softmax division -> every row sums to 1 up to f32 rounding
    assert bool(jnp.allclose(jnp.sum(out, axis=1), 1.0, atol=1e-5))

    print("KERNEL_OK")
</pallas_src>

<mosaic_0001>
module attributes {stable_mosaic.version = 11 : i64} {
  func.func @_mlp_kernel(%arg0: i32, %arg1: memref<8x128xbf16, #tpu.memory_space<vmem>>, %arg2: memref<128x128xbf16, #tpu.memory_space<vmem>>, %arg3: memref<8x128xf32, #tpu.memory_space<vmem>>) attributes {dimension_semantics = [#tpu.dimension_semantics<parallel>], iteration_bounds = array<i64: 2>, scalar_prefetch = 0 : i64, scratch_operands = 0 : i64, tpu.core_type = #tpu.core_type<tc>, window_params = [{transform_indices = @transform_0, window_bounds = array<i64: 8, 128>}, {pipeline_mode = #tpu.pipeline_mode<synchronous>, transform_indices = @transform_1, window_bounds = array<i64: 128, 128>}, {transform_indices = @transform_2, window_bounds = array<i64: 8, 128>}]} {
    %c0 = arith.constant 0 : index
    %c0_0 = arith.constant 0 : index
    %0 = vector.load %arg1[%c0, %c0_0] : memref<8x128xbf16, #tpu.memory_space<vmem>>, vector<8x128xbf16>
    %c0_1 = arith.constant 0 : index
    %c0_2 = arith.constant 0 : index
    %1 = vector.load %arg2[%c0_1, %c0_2] : memref<128x128xbf16, #tpu.memory_space<vmem>>, vector<56x8xbf16>
    %c0_3 = arith.constant 0 : index
    %c8 = arith.constant 8 : index
    %2 = vector.load %arg2[%c0_3, %c8] : memref<128x128xbf16, #tpu.memory_space<vmem>>, vector<56x1xbf16>
    %3 = arith.extf %2 : vector<56x1xbf16> to vector<56x1xf32>
    %c56 = arith.constant 56 : index
    %c0_4 = arith.constant 0 : index
    %4 = vector.load %arg2[%c56, %c0_4] : memref<128x128xbf16, #tpu.memory_space<vmem>>, vector<56x56xbf16>
    %c56_5 = arith.constant 56 : index
    %c56_6 = arith.constant 56 : index
    %5 = vector.load %arg2[%c56_5, %c56_6] : memref<128x128xbf16, #tpu.memory_space<vmem>>, vector<56x1xbf16>
    %6 = arith.extf %5 : vector<56x1xbf16> to vector<56x1xf32>
    %c112 = arith.constant 112 : index
    %c0_7 = arith.constant 0 : index
    %7 = vector.load %arg2[%c112, %c0_7] : memref<128x128xbf16, #tpu.memory_space<vmem>>, vector<8x56xbf16>
    %c112_8 = arith.constant 112 : index
    %c56_9 = arith.constant 56 : index
    %8 = vector.load %arg2[%c112_8, %c56_9] : memref<128x128xbf16, #tpu.memory_space<vmem>>, vector<8x1xbf16>
    %9 = arith.extf %8 : vector<8x1xbf16> to vector<8x1xf32>
    %cst = arith.constant dense<0.000000e+00> : vector<56x128xf32>
    %10 = tpu.matmul %1, %0, %cst {dimension_numbers = #tpu.dot_dimension_numbers<[1], [0], [0], [1], [0, 0, 1, 1], [], []>} : vector<56x8xbf16>, vector<8x128xbf16>, vector<56x128xf32> -> vector<56x128xf32>
    %11 = vector.broadcast %3 : vector<56x1xf32> to vector<56x128xf32>
    %12 = arith.addf %10, %11 : vector<56x128xf32>
    %cst_10 = arith.constant 0.000000e+00 : f32
    %13 = vector.broadcast %cst_10 : f32 to vector<56x128xf32>
    %14 = arith.maximumf %12, %13 : vector<56x128xf32>
    %15 = arith.truncf %14 : vector<56x128xf32> to vector<56x128xbf16>
    %cst_11 = arith.constant dense<0.000000e+00> : vector<56x128xf32>
    %16 = tpu.matmul %4, %15, %cst_11 {dimension_numbers = #tpu.dot_dimension_numbers<[1], [0], [0], [1], [0, 0, 1, 1], [], []>} : vector<56x56xbf16>, vector<56x128xbf16>, vector<56x128xf32> -> vector<56x128xf32>
    %17 = vector.broadcast %6 : vector<56x1xf32> to vector<56x128xf32>
    %18 = arith.addf %16, %17 : vector<56x128xf32>
    %cst_12 = arith.constant 0.000000e+00 : f32
    %19 = vector.broadcast %cst_12 : f32 to vector<56x128xf32>
    %20 = arith.maximumf %18, %19 : vector<56x128xf32>
    %21 = arith.truncf %20 : vector<56x128xf32> to vector<56x128xbf16>
    %cst_13 = arith.constant dense<0.000000e+00> : vector<8x128xf32>
    %22 = tpu.matmul %7, %21, %cst_13 {dimension_numbers = #tpu.dot_dimension_numbers<[1], [0], [0], [1], [0, 0, 1, 1], [], []>} : vector<8x56xbf16>, vector<56x128xbf16>, vector<8x128xf32> -> vector<8x128xf32>
    %23 = vector.broadcast %9 : vector<8x1xf32> to vector<8x128xf32>
    %24 = arith.addf %22, %23 : vector<8x128xf32>
    %25 = tpu.iota {dimensions = array<i32: 0>} : vector<8x128xi32>
    %c3_i32 = arith.constant 3 : i32
    %26 = vector.broadcast %c3_i32 : i32 to vector<8x128xi32>
    %27 = arith.cmpi slt, %25, %26 : vector<8x128xi32>
    %cst_14 = arith.constant 0xFF800000 : f32
    %28 = vector.broadcast %cst_14 : f32 to vector<8x128xf32>
    %29 = arith.select %27, %24, %28 : vector<8x128xi1>, vector<8x128xf32>
    %cst_15 = arith.constant dense<0xFF800000> : vector<128xf32>
    %30 = vector.multi_reduction <maximumf>, %29, %cst_15 [0] : vector<8x128xf32> to vector<128xf32>
    %31 = vector.shape_cast %30 : vector<128xf32> to vector<1x128xf32>
    %32 = vector.broadcast %31 : vector<1x128xf32> to vector<8x128xf32>
    %33 = arith.subf %24, %32 : vector<8x128xf32>
    %34 = math.exp %33 : vector<8x128xf32>
    %cst_16 = arith.constant 0.000000e+00 : f32
    %35 = vector.broadcast %cst_16 : f32 to vector<8x128xf32>
    %36 = arith.select %27, %34, %35 : vector<8x128xi1>, vector<8x128xf32>
    %cst_17 = arith.constant dense<0.000000e+00> : vector<128xf32>
    %37 = vector.multi_reduction <add>, %36, %cst_17 [0] : vector<8x128xf32> to vector<128xf32>
    %38 = vector.shape_cast %37 : vector<128xf32> to vector<1x128xf32>
    %39 = vector.broadcast %38 : vector<1x128xf32> to vector<8x128xf32>
    %40 = arith.divf %36, %39 : vector<8x128xf32>
    %c0_18 = arith.constant 0 : index
    %c0_19 = arith.constant 0 : index
    %41 = vector.load %arg3[%c0_18, %c0_19] : memref<8x128xf32, #tpu.memory_space<vmem>>, vector<8x128xf32>
    tpu.vector_store %arg3[%c0_18, %c0_19], %40 {strides = array<i32>} : memref<8x128xf32, #tpu.memory_space<vmem>>, vector<8x128xf32>,
    return
  }
  func.func @transform_0(%arg0: i32) -> (i32, i32) {
    %c0_i32 = arith.constant 0 : i32
    %c0_i32_0 = arith.constant 0 : i32
    return %c0_i32, %arg0 : i32, i32
  }
  func.func @transform_1(%arg0: i32) -> (i32, i32) {
    %c0_i32 = arith.constant 0 : i32
    %c0_i32_0 = arith.constant 0 : i32
    %c0_i32_1 = arith.constant 0 : i32
    return %c0_i32, %c0_i32_0 : i32, i32
  }
  func.func @transform_2(%arg0: i32) -> (i32, i32) {
    %c0_i32 = arith.constant 0 : i32
    %c0_i32_0 = arith.constant 0 : i32
    return %c0_i32, %arg0 : i32, i32
  }
}

</mosaic_0001>

<llo_original>
// kernel: tpu_custom_call.1
$region0: #{tpu_custom_call.1}
  #allocation0 [shape = 'u32[]', space=smem, size = 0x4, offset = 0x4, fixed_abs, tag = 'smem constant byte address 0x4 - core index']
  #allocation1 [shape = 'u32[144,128]{1,0:T(1,128)}', space=vmem, size = 0x12000, scoped, tag = 'internal scratch']
  %s0 = inlined_call_operand.hbm [shape: bf16[8,256], index: 0, kind: input, shape index: {}]
  %s1 = inlined_call_operand.hbm [shape: bf16[128,128], index: 1, kind: input, shape index: {}]
  %s2 = inlined_call_operand.hbm [shape: f32[8,256], index: 2, kind: output, shape index: {}]
  %s3 = sld [smem:[#allocation0]]
  $region49: #{tpu_custom_call.1} parent=0
    _
  %s5 = ssub.s32 1, %s3
  %s6 = scalar_select 0, %s5, %s3
  $region1: #{tpu_custom_call.1} parent=0
    #allocation2 [shape = 'u8[4096]{0}', space=vmem, size = 0x1000, scoped, tag = 'input window, operand 0']
    #allocation3 [shape = 's32[2]{0}', space=sflag, size = 0x8, scoped, tag = 'scoped memory for tpu_custom_call.1']
    #allocation4 [shape = 's32[2]{0}', space=sflag, size = 0x8, scoped, tag = 'scoped memory for tpu_custom_call.1']
    #allocation5 [shape = 'u8[32768]{0}', space=vmem, size = 0x8000, scoped, tag = 'input window, operand 1, single buffered']
    #allocation6 [shape = 's32[1]{0}', space=sflag, size = 0x4, scoped, tag = 'scoped memory for tpu_custom_call.1']
    #allocation7 [shape = 'u8[8192]{0}', space=vmem, size = 0x2000, scoped, tag = 'output window, operand 0']
    %7 = vsyncpa [#allocation3], 0
    %s8 = scalar_lea.sflag [#allocation3], 1
    %9 = vsyncpa %s8, 0
    %10 = vsyncpa [#allocation6], 0
    %11 = vsyncpa [#allocation4], 0
    %s12 = scalar_lea.sflag [#allocation4], 1
    %13 = vsyncpa %s12, 0
    loop: start=0, step=1, limit=4
    $region2: #{tpu_custom_call.1} parent=1 // loop_pre_header
      _
    $region3: #{tpu_custom_call.1} parent=1 // loop_header
      %s15 = sphi 0, %s19
      %p16 = scmp.ge.s32.totalorder %s15, 4
      %s25 = sphi 0, %s27
      %s28 = sphi 0, %s25
      %s29 = sphi 0, %s28
      %s45 = sphi 0, %s29
      %s49 = sphi 0, %s49
      %s51 = sphi 0, %s49
      %s52 = sphi 0, %s51
      %s66 = sphi 0, %s52
      %s72 = sphi 0, %s74
      %s75 = sphi 0, %s72
      %s76 = sphi 0, %s75
      %s92 = sphi 0, %s76
    $region4: #{tpu_custom_call.1} parent=1 // loop_header_branch
      %18 = sbr.rel (%p16) target = $region8
    $region5: #{tpu_custom_call.1} parent=1 // loop_body
      %s20 = ssub.s32 %s15, 1
      %s21 = ssub.s32 %s15, 2
      %s22 = sadd.s32 %s15, 1
      %s23 = ssub.s32 %s15, %s22
      %p24 = scmp.eq.s32.totalorder %s23, 0
      %s26 = sadd.s32 %s25, 1
      %s27 = scalar_select %p24, %s25, %s26
      %p30 = pneg %p24
      %p31 = scmp.eq.s32.totalorder %s15, 1
      %p32 = por %p30, %p31
      %p33 = scmp.ne.s32.totalorder %s25, %s28
      %p34 = scmp.eq.s32.totalorder %s15, 0
      %p35 = por %p33, %p34
      %p36 = scmp.ne.s32.totalorder %s25, %s28
      %p37 = scmp.eq.s32.totalorder %s20, 1
      %p38 = por %p36, %p37
      %p39 = scmp.ne.s32.totalorder %s28, %s29
      %p40 = scmp.eq.s32.totalorder %s20, 0
      %p41 = por %p39, %p40
      %p42 = scmp.ne.s32.totalorder %s28, %s29
      %p43 = scmp.eq.s32.totalorder %s21, 1
      %p44 = por %p42, %p43
      %p46 = scmp.ne.s32.totalorder %s29, %s45
      %p47 = scmp.eq.s32.totalorder %s21, 0
      %p48 = por %p46, %p47
      %s50 = sadd.s32 %s49, 1
      %p53 = scmp.eq.s32.totalorder %s15, 1
      %p54 = scmp.ne.s32.totalorder %s49, %s51
      %p55 = scmp.eq.s32.totalorder %s15, 0
      %p56 = por %p54, %p55
      %p57 = scmp.ne.s32.totalorder %s49, %s51
      %p58 = scmp.eq.s32.totalorder %s20, 1
      %p59 = por %p57, %p58
      %p60 = scmp.ne.s32.totalorder %s51, %s52
      %p61 = scmp.eq.s32.totalorder %s20, 0
      %p62 = por %p60, %p61
      %p63 = scmp.ne.s32.totalorder %s51, %s52
      %p64 = scmp.eq.s32.totalorder %s21, 1
      %p65 = por %p63, %p64
      %p67 = scmp.ne.s32.totalorder %s52, %s66
      %p68 = scmp.eq.s32.totalorder %s21, 0
      %p69 = por %p67, %p68
      %s70 = ssub.s32 %s15, %s22
      %p71 = scmp.eq.s32.totalorder %s70, 0
      %s73 = sadd.s32 %s72, 1
      %s74 = scalar_select %p71, %s72, %s73
      %p77 = pneg %p71
      %p78 = scmp.eq.s32.totalorder %s15, 1
      %p79 = por %p77, %p78
      %p80 = scmp.ne.s32.totalorder %s72, %s75
      %p81 = scmp.eq.s32.totalorder %s15, 0
      %p82 = por %p80, %p81
      %p83 = scmp.ne.s32.totalorder %s72, %s75
      %p84 = scmp.eq.s32.totalorder %s20, 1
      %p85 = por %p83, %p84
      %p86 = scmp.ne.s32.totalorder %s75, %s76
      %p87 = scmp.eq.s32.totalorder %s20, 0
      %p88 = por %p86, %p87
      %p89 = scmp.ne.s32.totalorder %s75, %s76
      %p90 = scmp.eq.s32.totalorder %s21, 1
      %p91 = por %p89, %p90
      %p93 = scmp.ne.s32.totalorder %s76, %s92
      %p94 = scmp.eq.s32.totalorder %s21, 0
      %p95 = por %p93, %p94
      %p96 = scmp.le.s32.totalorder 1, %s15
      %p97 = scmp.lt.s32.totalorder %s15, 3
      %p98 = pnand %p96, %p97
      %p99 = pneg %p98
      // Predicated region
      $region9: #{tpu_custom_call.1} parent=5 // pred_check
        _
      $region10: #{tpu_custom_call.1} parent=5 // pred_check_branch
        %101 = sbr.rel (%p98) target = $region12
      $region11: #{tpu_custom_call.1} parent=5 // pred_region
        %s102 = ssub.s32 %s15, 1
        // Predicated region
        $region13: #{tpu_custom_call.1} parent=11 // pred_check
          %p103 = pneg %p62
        $region14: #{tpu_custom_call.1} parent=11 // pred_check_branch
          %105 = sbr.rel (%p103) target = $region16
        $region15: #{tpu_custom_call.1} parent=11 // pred_region
          %s107 = ssub.s32 1024, 1024
          %108 = vsyncadd [#allocation6], %s107
          %s109 = sshll.u32 [#allocation5], 4
          %s110 = int_to_ptr.vmem [resolvable:$true] %s109
          %115 = dma.hbm_to_vmem [thread:$0]  %s1, 1024, %s110, [#allocation6], 64, 64, 4
        $region16: #{tpu_custom_call.1} parent=11 // pred_fallthru
          _
      $region12: #{tpu_custom_call.1} parent=5 // pred_fallthru
        _
      %p116 = scmp.lt.s32.totalorder %s15, 2
      // Predicated region
      $region17: #{tpu_custom_call.1} parent=5 // pred_check
        %p117 = pneg %p116
      $region18: #{tpu_custom_call.1} parent=5 // pred_check_branch
        %119 = sbr.rel (%p117) target = $region20
      $region19: #{tpu_custom_call.1} parent=5 // pred_region
        // Predicated region
        $region21: #{tpu_custom_call.1} parent=19 // pred_check
          %p120 = pneg %p35
        $region22: #{tpu_custom_call.1} parent=19 // pred_check_branch
          %122 = sbr.rel (%p120) target = $region24
        $region23: #{tpu_custom_call.1} parent=19 // pred_region
          %s123 = sand.u32 %s25, 1
          %s124 = scalar_lea.sflag [#allocation3], %s123
          %s125 = sand.u32 %s25, 1
          %s126 = smul.addr %s125, 4
          %s127 = scalar_lea.vmem [#allocation2], %s126
          %s129 = ssub.s32 64, 64
          %130 = vsyncadd %s124, %s129
          %s131 = smul.addr %s15, 64
          %s132 = scalar_lea.hbm %s0, %s131
          %s134 = sshll.u32 %s127, 4
          %s135 = int_to_ptr.vmem [resolvable:$true] %s134
          %137 = dma.hbm_to_vmem [thread:$0]  %s132, 64, %s135, %s124
        $region24: #{tpu_custom_call.1} parent=19 // pred_fallthru
          _
      $region20: #{tpu_custom_call.1} parent=5 // pred_fallthru
        _
      %p138 = scmp.le.s32.totalorder 1, %s15
      %p139 = scmp.lt.s32.totalorder %s15, 3
      %p140 = pnand %p138, %p139
      %p141 = pneg %p140
      // Predicated region
      $region25: #{tpu_custom_call.1} parent=5 // pred_check
        _
      $region26: #{tpu_custom_call.1} parent=5 // pred_check_branch
        %143 = sbr.rel (%p140) target = $region28
      $region27: #{tpu_custom_call.1} parent=5 // pred_region
        %s144 = ssub.s32 %s15, 1
        %s145 = sand.u32 %s28, 1
        %s146 = scalar_lea.sflag [#allocation3], %s145
        %s147 = sand.u32 %s28, 1
        %s148 = smul.addr %s147, 4
        %s149 = scalar_lea.vmem [#allocation2], %s148
        // Predicated region
        $region29: #{tpu_custom_call.1} parent=27 // pred_check
          %p150 = pneg %p41
        $region30: #{tpu_custom_call.1} parent=27 // pred_check_branch
          %152 = sbr.rel (%p150) target = $region32
        $region31: #{tpu_custom_call.1} parent=27 // pred_region
          %153 = dma.done %s146, 64
        $region32: #{tpu_custom_call.1} parent=27 // pred_fallthru
          _
        // Predicated region
        $region33: #{tpu_custom_call.1} parent=27 // pred_check
          %p154 = pneg %p62
        $region34: #{tpu_custom_call.1} parent=27 // pred_check_branch
          %156 = sbr.rel (%p154) target = $region36
        $region35: #{tpu_custom_call.1} parent=27 // pred_region
          %157 = dma.done [#allocation6], 1024
        $region36: #{tpu_custom_call.1} parent=27 // pred_fallthru
          _
        %s158 = sand.u32 %s28, 1
        %s159 = scalar_lea.sflag [#allocation3], %s158
        %s160 = sand.u32 %s28, 1
        %s161 = smul.addr %s160, 4
        %s162 = scalar_lea.vmem [#allocation2], %s161
        %p163 = pneg %p41
        %p164 = pneg %p38
        %p165 = pneg %p62
        %p166 = pneg %p59
        %p167 = pneg %p88
        %p168 = pneg %p85
        %s169 = sand.u32 %s75, 1
        %s170 = scalar_lea.sflag [#allocation4], %s169
        %s171 = sand.u32 %s75, 1
        %s172 = smul.addr %s171, 8
        %s173 = scalar_lea.vmem [#allocation7], %s172
        %v175 = vld [vmem:[%s149] sm:$0xf]
        %v176 = vld [vmem:[#allocation5] sm:$0xf]
        %v177 = vld [vmem:[#allocation5 + $0x4] sm:$0xf]
        %v178 = vld [vmem:[#allocation5 + $0x8] sm:$0xf]
        %v179 = vld [vmem:[#allocation5 + $0xc] sm:$0xf]
        %v180 = vld [vmem:[#allocation5 + $0x10] sm:$0xf]
        %v181 = vld [vmem:[#allocation5 + $0x14] sm:$0xf]
        %v182 = vld [vmem:[#allocation5 + $0x18] sm:$0xf]
        %v183 = vunpack.c.l.bf16 %v176
        %v184 = vunpack.c.l.bf16 %v177
        %v185 = vunpack.c.l.bf16 %v178
        %v186 = vunpack.c.l.bf16 %v179
        %v187 = vunpack.c.l.bf16 %v180
        %v188 = vunpack.c.l.bf16 %v181
        %v189 = vunpack.c.l.bf16 %v182
        %v190 = vld [vmem:[#allocation5 + $0x1c] sm:$0xf]
        %v191 = vld [vmem:[#allocation5 + $0x20] sm:$0xf]
        %v192 = vld [vmem:[#allocation5 + $0x24] sm:$0xf]
        %v193 = vld [vmem:[#allocation5 + $0x28] sm:$0xf]
        %v194 = vld [vmem:[#allocation5 + $0x2c] sm:$0xf]
        %v195 = vld [vmem:[#allocation5 + $0x30] sm:$0xf]
        %v196 = vld [vmem:[#allocation5 + $0x34] sm:$0xf]
        %v197 = vunpack.c.l.bf16 %v190
        %v198 = vunpack.c.l.bf16 %v191
        %v199 = vunpack.c.l.bf16 %v192
        %v200 = vunpack.c.l.bf16 %v193
        %v201 = vunpack.c.l.bf16 %v194
        %v202 = vunpack.c.l.bf16 %v195
        %v203 = vunpack.c.l.bf16 %v196
        %v204 = vld [vmem:[#allocation5 + $0x38] sm:$0xf]
        %v205 = vunpack.c.l.bf16 %v204
        %207 = vset.pattern.permute.xlu0 8
        %208 = vperm.xlu0 %207, %v183
        %v209 = vpop.permute.xlu0 %208
        %212 = vset.pattern.permute.xlu0 8
        %213 = vperm.xlu0 %212, %v184
        %v214 = vpop.permute.xlu0 %213
        %217 = vset.pattern.permute.xlu0 8
        %218 = vperm.xlu0 %217, %v185
        %v219 = vpop.permute.xlu0 %218
        %222 = vset.pattern.permute.xlu0 8
        %223 = vperm.xlu0 %222, %v186
        %v224 = vpop.permute.xlu0 %223
        %227 = vset.pattern.permute.xlu0 8
        %228 = vperm.xlu0 %227, %v187
        %v229 = vpop.permute.xlu0 %228
        %232 = vset.pattern.permute.xlu0 8
        %233 = vperm.xlu0 %232, %v188
        %v234 = vpop.permute.xlu0 %233
        %237 = vset.pattern.permute.xlu0 8
        %238 = vperm.xlu0 %237, %v189
        %v239 = vpop.permute.xlu0 %238
        %v248 = vunpack.c.l.b16 %v176
        %v249 = vunpack.c.l.b16 %v177
        %v250 = vunpack.c.l.b16 %v178
        %v251 = vunpack.c.l.b16 %v179
        %v252 = vunpack.c.l.b16 %v180
        %v253 = vunpack.c.l.b16 %v181
        %v254 = vunpack.c.l.b16 %v182
        %v255 = vpack.c.b16 %v249, %v248
        %v256 = vpack.c.b16 %v251, %v250
        %v257 = vpack.c.b16 %v253, %v252
        %v258 = vpack.c.b16 %v254, %v254
        %vm259 = vcmask 64512
        %v261 = vsel %vm259, %v255, 0
        %v264 = vsel %vm259, %v256, 0
        %v267 = vsel %vm259, %v257, 0
        %v270 = vsel %vm259, %v258, 0
        %vm272 = vcmask 1043456
        %v274 = vsel %vm272, %v175, 0
        %276 = vmatprep.subr.bf16.mxu0 0
        %277 = vmatpush1.bf16.msra.mxu0 %v274
        %278 = vmatprep.subr.bf16.mxu0 0
        %279 = vmatpush1.bf16.msra.mxu0 0
        %280 = vmatprep.subr.bf16.mxu0 0
        %281 = vmatpush1.bf16.msra.mxu0 0
        %282 = vmatprep.subr.bf16.mxu0 0
        %283 = vmatpush1.bf16.msra.mxu0 0
        %284 = vmatprep.subr.bf16.mxu0 0
        %285 = vmatpush1.bf16.msra.mxu0 0
        %286 = vmatprep.subr.bf16.mxu0 0
        %287 = vmatpush1.bf16.msra.mxu0 0
        %288 = vmatprep.subr.bf16.mxu0 0
        %289 = vmatpush1.bf16.msra.mxu0 0
        %290 = vmatprep.subr.bf16.mxu0 0
        %291 = vmatpush1.bf16.msra.mxu0 0
        %292 = vmatprep.subr.bf16.mxu0 0
        %293 = vmatpush1.bf16.msra.mxu0 0
        %294 = vmatprep.subr.bf16.mxu0 0
        %295 = vmatpush1.bf16.msra.mxu0 0
        %296 = vmatprep.subr.bf16.mxu0 0
        %297 = vmatpush1.bf16.msra.mxu0 0
        %298 = vmatprep.subr.bf16.mxu0 0
        %299 = vmatpush1.bf16.msra.mxu0 0
        %300 = vmatprep.subr.bf16.mxu0 0
        %301 = vmatpush1.bf16.msra.mxu0 0
        %302 = vmatprep.subr.bf16.mxu0 0
        %303 = vmatpush1.bf16.msra.mxu0 0
        %304 = vmatprep.subr.bf16.mxu0 0
        %305 = vmatpush1.bf16.msra.mxu0 0
        %306 = vmatprep.subr.bf16.mxu0 0
        %307 = vmatpush1.bf16.msra.mxu0 0
        %308 = vmatprep.mubr.bf16.mxu0 0
        %309 = vmatmul.mubr.bf16.gmra.mrb[0].mxu0 %v261
        %v310 = vpop.f32.mrb[0].mxu0
        %v311 = vadd.f32 %v209, %v310
        %v312 = vpop.f32.mrb[0].mxu0
        %v313 = vpop.f32.mrb[0].mxu0
        %v314 = vadd.f32 %v214, %v313
        %v315 = vpop.f32.mrb[0].mxu0
        %316 = vmatprep.mubr.bf16.mxu0 0
        %317 = vmatmul.mubr.bf16.gmra.mrb[0].mxu0 %v264
        %v318 = vpop.f32.mrb[0].mxu0
        %v319 = vadd.f32 %v219, %v318
        %v320 = vpop.f32.mrb[0].mxu0
        %v321 = vpop.f32.mrb[0].mxu0
        %v322 = vadd.f32 %v224, %v321
        %v323 = vpop.f32.mrb[0].mxu0
        %324 = vmatprep.mubr.bf16.mxu0 0
        %325 = vmatmul.mubr.bf16.gmra.mrb[0].mxu0 %v267
        %v326 = vpop.f32.mrb[0].mxu0
        %v327 = vadd.f32 %v229, %v326
        %v328 = vpop.f32.mrb[0].mxu0
        %v329 = vpop.f32.mrb[0].mxu0
        %v330 = vadd.f32 %v234, %v329
        %v331 = vpop.f32.mrb[0].mxu0
        %332 = vmatprep.mubr.bf16.mxu0 0
        %333 = vmatmul.mubr.bf16.gmra.mrb[0].mxu0 %v270
        %v334 = vpop.f32.mrb[0].mxu0
        %v335 = vadd.f32 %v239, %v334
        %v336 = vpop.f32.mrb[0].mxu0
        %v337 = vpop.f32.mrb[0].mxu0
        %v338 = vpop.f32.mrb[0].mxu0
        %339 = vdwg.mxu0
        %v340 = vmax.f32 %v311, 0.0
        %v341 = vmax.f32 %v314, 0.0
        %v342 = vmax.f32 %v319, 0.0
        %v343 = vmax.f32 %v322, 0.0
        %v344 = vmax.f32 %v327, 0.0
        %v345 = vmax.f32 %v330, 0.0
        %v346 = vmax.f32 %v335, 0.0
        %v347 = vpack.c.bf16 %v341, %v340
        %v348 = vpack.c.bf16 %v343, %v342
        %v349 = vpack.c.bf16 %v345, %v344
        %v350 = vpack.c.bf16 %v346, %v346
        %352 = vset.pattern.permute.xlu0 56
        %353 = vperm.xlu0 %352, %v197
        %v354 = vpop.permute.xlu0 %353
        %357 = vset.pattern.permute.xlu0 56
        %358 = vperm.xlu0 %357, %v198
        %v359 = vpop.permute.xlu0 %358
        %362 = vset.pattern.permute.xlu0 56
        %363 = vperm.xlu0 %362, %v199
        %v364 = vpop.permute.xlu0 %363
        %367 = vset.pattern.permute.xlu0 56
        %368 = vperm.xlu0 %367, %v200
        %v369 = vpop.permute.xlu0 %368
        %372 = vset.pattern.permute.xlu0 56
        %373 = vperm.xlu0 %372, %v201
        %v374 = vpop.permute.xlu0 %373
        %377 = vset.pattern.permute.xlu0 56
        %378 = vperm.xlu0 %377, %v202
        %v379 = vpop.permute.xlu0 %378
        %382 = vset.pattern.permute.xlu0 56
        %383 = vperm.xlu0 %382, %v203
        %v384 = vpop.permute.xlu0 %383
        %v393 = vunpack.c.l.b16 %v190
        %v394 = vunpack.c.l.b16 %v191
        %v395 = vunpack.c.l.b16 %v192
        %v396 = vunpack.c.l.b16 %v193
        %v397 = vunpack.c.l.b16 %v194
        %v398 = vunpack.c.l.b16 %v195
        %v399 = vunpack.c.l.b16 %v196
        %v400 = vpack.c.b16 %v394, %v393
        %v401 = vpack.c.b16 %v396, %v395
        %v402 = vpack.c.b16 %v398, %v397
        %v403 = vpack.c.b16 %v399, %v399
        %vm404 = vcmask 457728
        %v406 = vsel %vm404, %v400, 0
        %v409 = vsel %vm404, %v401, 0
        %v412 = vsel %vm404, %v402, 0
        %v415 = vsel %vm404, %v403, 0
        %v418 = vsel %vm272, %v350, 0
        %420 = vmatprep.subr.bf16.mxu0 0
        %421 = vmatpush1.bf16.msra.mxu0 %v347
        %422 = vmatprep.subr.bf16.mxu0 0
        %423 = vmatpush1.bf16.msra.mxu0 %v348
        %424 = vmatprep.subr.bf16.mxu0 0
        %425 = vmatpush1.bf16.msra.mxu0 %v349
        %426 = vmatprep.subr.bf16.mxu0 0
        %427 = vmatpush1.bf16.msra.mxu0 %v418
        %428 = vmatprep.subr.bf16.mxu0 0
        %429 = vmatpush1.bf16.msra.mxu0 0
        %430 = vmatprep.subr.bf16.mxu0 0
        %431 = vmatpush1.bf16.msra.mxu0 0
        %432 = vmatprep.subr.bf16.mxu0 0
        %433 = vmatpush1.bf16.msra.mxu0 0
        %434 = vmatprep.subr.bf16.mxu0 0
        %435 = vmatpush1.bf16.msra.mxu0 0
        %436 = vmatprep.subr.bf16.mxu0 0
        %437 = vmatpush1.bf16.msra.mxu0 0
        %438 = vmatprep.subr.bf16.mxu0 0
        %439 = vmatpush1.bf16.msra.mxu0 0
        %440 = vmatprep.subr.bf16.mxu0 0
        %441 = vmatpush1.bf16.msra.mxu0 0
        %442 = vmatprep.subr.bf16.mxu0 0
        %443 = vmatpush1.bf16.msra.mxu0 0
        %444 = vmatprep.subr.bf16.mxu0 0
        %445 = vmatpush1.bf16.msra.mxu0 0
        %446 = vmatprep.subr.bf16.mxu0 0
        %447 = vmatpush1.bf16.msra.mxu0 0
        %448 = vmatprep.subr.bf16.mxu0 0
        %449 = vmatpush1.bf16.msra.mxu0 0
        %450 = vmatprep.subr.bf16.mxu0 0
        %451 = vmatpush1.bf16.msra.mxu0 0
        %452 = vmatprep.mubr.bf16.mxu0 0
        %453 = vmatmul.mubr.bf16.gmra.mrb[0].mxu0 %v406
        %v454 = vpop.f32.mrb[0].mxu0
        %v455 = vadd.f32 %v354, %v454
        %v456 = vpop.f32.mrb[0].mxu0
        %v457 = vpop.f32.mrb[0].mxu0
        %v458 = vadd.f32 %v359, %v457
        %v459 = vpop.f32.mrb[0].mxu0
        %460 = vmatprep.mubr.bf16.mxu0 0
        %461 = vmatmul.mubr.bf16.gmra.mrb[0].mxu0 %v409
        %v462 = vpop.f32.mrb[0].mxu0
        %v463 = vadd.f32 %v364, %v462
        %v464 = vpop.f32.mrb[0].mxu0
        %v465 = vpop.f32.mrb[0].mxu0
        %v466 = vadd.f32 %v369, %v465
        %v467 = vpop.f32.mrb[0].mxu0
        %468 = vmatprep.mubr.bf16.mxu0 0
        %469 = vmatmul.mubr.bf16.gmra.mrb[0].mxu0 %v412
        %v470 = vpop.f32.mrb[0].mxu0
        %v471 = vadd.f32 %v374, %v470
        %v472 = vpop.f32.mrb[0].mxu0
        %v473 = vpop.f32.mrb[0].mxu0
        %v474 = vadd.f32 %v379, %v473
        %v475 = vpop.f32.mrb[0].mxu0
        %476 = vmatprep.mubr.bf16.mxu0 0
        %477 = vmatmul.mubr.bf16.gmra.mrb[0].mxu0 %v415
        %v478 = vpop.f32.mrb[0].mxu0
        %v479 = vadd.f32 %v384, %v478
        %v480 = vpop.f32.mrb[0].mxu0
        %v481 = vpop.f32.mrb[0].mxu0
        %v482 = vpop.f32.mrb[0].mxu0
        %483 = vdwg.mxu0
        %v484 = vmax.f32 %v455, 0.0
        %v485 = vmax.f32 %v458, 0.0
        %v486 = vmax.f32 %v463, 0.0
        %v487 = vmax.f32 %v466, 0.0
        %v488 = vmax.f32 %v471, 0.0
        %v489 = vmax.f32 %v474, 0.0
        %v490 = vmax.f32 %v479, 0.0
        %v491 = vpack.c.bf16 %v485, %v484
        %v492 = vpack.c.bf16 %v487, %v486
        %v493 = vpack.c.bf16 %v489, %v488
        %v494 = vpack.c.bf16 %v490, %v490
        %496 = vset.pattern.permute.xlu0 56
        %497 = vperm.xlu0 %496, %v205
        %v498 = vpop.permute.xlu0 %497
        %v501 = vsel %vm404, %v204, 0
        %v504 = vsel %vm272, %v494, 0
        %506 = vmatprep.subr.bf16.mxu0 0
        %507 = vmatpush1.bf16.msra.mxu0 %v491
        %508 = vmatprep.subr.bf16.mxu0 0
        %509 = vmatpush1.bf16.msra.mxu0 %v492
        %510 = vmatprep.subr.bf16.mxu0 0
        %511 = vmatpush1.bf16.msra.mxu0 %v493
        %512 = vmatprep.subr.bf16.mxu0 0
        %513 = vmatpush1.bf16.msra.mxu0 %v504
        %514 = vmatprep.subr.bf16.mxu0 0
        %515 = vmatpush1.bf16.msra.mxu0 0
        %516 = vmatprep.subr.bf16.mxu0 0
        %517 = vmatpush1.bf16.msra.mxu0 0
        %518 = vmatprep.subr.bf16.mxu0 0
        %519 = vmatpush1.bf16.msra.mxu0 0
        %520 = vmatprep.subr.bf16.mxu0 0
        %521 = vmatpush1.bf16.msra.mxu0 0
        %522 = vmatprep.subr.bf16.mxu0 0
        %523 = vmatpush1.bf16.msra.mxu0 0
        %524 = vmatprep.subr.bf16.mxu0 0
        %525 = vmatpush1.bf16.msra.mxu0 0
        %526 = vmatprep.subr.bf16.mxu0 0
        %527 = vmatpush1.bf16.msra.mxu0 0
        %528 = vmatprep.subr.bf16.mxu0 0
        %529 = vmatpush1.bf16.msra.mxu0 0
        %530 = vmatprep.subr.bf16.mxu0 0
        %531 = vmatpush1.bf16.msra.mxu0 0
        %532 = vmatprep.subr.bf16.mxu0 0
        %533 = vmatpush1.bf16.msra.mxu0 0
        %534 = vmatprep.subr.bf16.mxu0 0
        %535 = vmatpush1.bf16.msra.mxu0 0
        %536 = vmatprep.subr.bf16.mxu0 0
        %537 = vmatpush1.bf16.msra.mxu0 0
        %538 = vmatprep.mubr.bf16.mxu0 0
        %539 = vmatmul.mubr.bf16.gmra.mrb[0].mxu0 %v501
        %v540 = vpop.f32.mrb[0].mxu0
        %v541 = vadd.f32 %v498, %v540
        %v542 = vpop.f32.mrb[0].mxu0
        %v543 = vpop.f32.mrb[0].mxu0
        %v544 = vpop.f32.mrb[0].mxu0
        %545 = vdwg.mxu0
        %v546 = vlaneseq
        %v547 = vshrl.u32 %v546, 7
        %vm548 = vcmp.lt.s32.totalorder %v547, 3
        %v549 = vsel %vm548, %v541, -inf
        %v550 = vrot.slane %v549, 4
        %v551 = vmax.f32 %v549, %v550
        %v552 = vrot.slane %v551, 2
        %v553 = vmax.f32 %v551, %v552
        %v554 = vrot.slane %v553, 1
        %v555 = vmax.f32 %v553, %v554
        %v556 = vsub.f32 %v541, %v555
        %v557 = vmul.f32 %v556, 1.442695
        %v558 = vpow.pop %v557
        %v559 = vsel %vm548, %v558, 0.0
        %v560 = vrot.slane %v559, 4
        %v561 = vadd.f32 %v559, %v560
        %v562 = vrot.slane %v561, 2
        %v563 = vadd.f32 %v561, %v562
        %v564 = vrot.slane %v563, 1
        %v565 = vadd.f32 %v563, %v564
        %v566 = vrcp.pop %v565
        %v567 = vmul.f32 %v559, %v566
        %568 = vst [vmem:[%s173] sm:$0xff] %v567
        %s569 = sand.u32 %s75, 1
        %s570 = scalar_lea.sflag [#allocation4], %s569
        %s571 = sand.u32 %s75, 1
        %s572 = smul.addr %s571, 8
        %s573 = scalar_lea.vmem [#allocation7], %s572
        // Predicated region
        $region37: #{tpu_custom_call.1} parent=27 // pred_check
          %p574 = pneg %p85
        $region38: #{tpu_custom_call.1} parent=27 // pred_check_branch
          %576 = sbr.rel (%p574) target = $region40
        $region39: #{tpu_custom_call.1} parent=27 // pred_region
          %s578 = ssub.s32 128, 128
          %579 = vsyncadd %s570, %s578
          %s580 = smul.addr %s20, 128
          %s581 = scalar_lea.hbm %s2, %s580
          %s583 = sshll.u32 %s573, 4
          %s584 = int_to_ptr.vmem [resolvable:$true] %s583
          %586 = dma.vmem_to_hbm [thread:$0]  %s584, 128, %s581, %s570
        $region40: #{tpu_custom_call.1} parent=27 // pred_fallthru
          _
      $region28: #{tpu_custom_call.1} parent=5 // pred_fallthru
        _
      %p587 = scmp.le.s32.totalorder 2, %s15
      // Predicated region
      $region41: #{tpu_custom_call.1} parent=5 // pred_check
        %p588 = pneg %p587
      $region42: #{tpu_custom_call.1} parent=5 // pred_check_branch
        %590 = sbr.rel (%p588) target = $region44
      $region43: #{tpu_custom_call.1} parent=5 // pred_region
        %s591 = ssub.s32 %s15, 2
        // Predicated region
        $region45: #{tpu_custom_call.1} parent=43 // pred_check
          %p592 = pneg %p91
        $region46: #{tpu_custom_call.1} parent=43 // pred_check_branch
          %594 = sbr.rel (%p592) target = $region48
        $region47: #{tpu_custom_call.1} parent=43 // pred_region
          %s595 = sand.u32 %s76, 1
          %s596 = scalar_lea.sflag [#allocation4], %s595
          %s597 = sand.u32 %s76, 1
          %s598 = smul.addr %s597, 8
          %s599 = scalar_lea.vmem [#allocation7], %s598
          %600 = dma.done %s596, 128
        $region48: #{tpu_custom_call.1} parent=43 // pred_fallthru
          _
      $region44: #{tpu_custom_call.1} parent=5 // pred_fallthru
        _
    $region6: #{tpu_custom_call.1} parent=1 // loop_footer
      %s19 = sadd.s32 1, %s15
    $region7: #{tpu_custom_call.1} parent=1 // loop_footer_branch
      %14 = sbr.rel target = $region3
    $region8: #{tpu_custom_call.1} parent=1 // loop_exit
      _
    %601 = vsyncpa [#allocation3], 1
    %s602 = scalar_lea.sflag [#allocation3], 1
    %603 = vsyncpa %s602, 1
    %604 = vsyncpa [#allocation6], 1
    %605 = vsyncpa [#allocation4], 1
    %s606 = scalar_lea.sflag [#allocation4], 1
    %607 = vsyncpa %s606, 1

</llo_original>
